<compile_context>
chip_gen: v6e
topology: v6e:2x2x1
jax: 0.10.0
libtpu: 0.0.40
codegen_flags: <defaults>
</compile_context>

<pallas_src>
import functools

import jax
import jax.numpy as jnp
from jax.experimental import pallas as pl
from jax.experimental.pallas import tpu as pltpu

LANE = 128      # lane width: last-dim alignment for vregs / MXU
SUBLANE = 8     # f32 sublane width


def _round_up(x, m):
    return ((x + m - 1) // m) * m


def linear4_kernel(x_ref,
                   w1_ref, b1_ref,
                   w2_ref, b2_ref,
                   w3_ref, b3_ref,
                   w4_ref, b4_ref,
                   o_ref,
                   h_ref):
    """Fused 4x (x @ W + b) on one batch tile.

    x_ref  : [tm, in_p]      compute dtype (bf16 by default)
    wK_ref : [d_in, d_out]   pre-transposed [K, N] layout (MXU weight-stationary)
    bK_ref : [1, d_out]      f32
    o_ref  : [tm, out_p]     output dtype (f32 by default)
    h_ref  : [tm, out_p]     compute-dtype VMEM scratch for inter-layer staging
    """
    dims = (((1,), (0,)), ((), ()))   # contract x[-1] with W[0]  ==  x @ W

    def affine(h, w_ref, b_ref):
        acc = jax.lax.dot_general(
            h, w_ref[...],
            dimension_numbers=dims,
            preferred_element_type=jnp.float32)
        return acc + b_ref[...]                     # bias add in f32

    cdt = h_ref.dtype
    h_ref[...] = affine(x_ref[...], w1_ref, b1_ref).astype(cdt)
    h_ref[...] = affine(h_ref[...], w2_ref, b2_ref).astype(cdt)
    h_ref[...] = affine(h_ref[...], w3_ref, b3_ref).astype(cdt)
    o_ref[...] = affine(h_ref[...], w4_ref, b4_ref).astype(o_ref.dtype)


@functools.partial(
    jax.jit,
    static_argnames=("block_m", "compute_dtype", "out_dtype",
                     "single_buffer_weights"))
def linear4(x, params, block_m=1024, compute_dtype=jnp.bfloat16,
            out_dtype=jnp.float32, single_buffer_weights=True):
    """x: [B, in_size] f32.  params: torch-layout w1..w4 ([out,in]), b1..b4 ([out])."""
    B, in_size = x.shape
    out_size = params["w1"].shape[0]
    csize = jnp.dtype(compute_dtype).itemsize
    osize = jnp.dtype(out_dtype).itemsize

    # Lane-dense padded feature dims (multiples of 128).
    in_p = _round_up(in_size, LANE)
    out_p = _round_up(out_size, LANE)

    # ---- VMEM budget -> derive the batch tile tm ---------------------------
    try:
        vmem_cap = pltpu.get_tpu_info().vmem_capacity_bytes
    except Exception:                               # conservative: v7x per-TC VMEM
        vmem_cap = 64 * 1024 * 1024
    budget = int(0.80 * vmem_cap)

    w_buf = 1 if single_buffer_weights else 2
    w_bytes = (in_p * out_p + 3 * out_p * out_p) * csize * w_buf
    b_bytes = 4 * out_p * 4 * w_buf
    # Per batch-row bytes: double-buffered x tile, double-buffered out tile,
    # compute-dtype activation scratch.
    per_row = 2 * in_p * csize + 2 * out_p * osize + out_p * csize

    tm_align = max(SUBLANE, 32 // csize)            # 8 for f32, 16 for bf16
    avail = budget - w_bytes - b_bytes
    if avail < per_row * tm_align:
        # TODO(synk): split the 4-layer chain into two kernels when the
        # resident weight set alone exceeds the per-core VMEM budget (v7x
        # with very large out_size).
        raise ValueError("Linear4 weights do not fit in the VMEM budget; "
                         "reduce out_size or split the layer chain.")

    tm_vmem = max(tm_align, (avail // per_row) // tm_align * tm_align)
    tm = min(block_m, tm_vmem, _round_up(B, tm_align))
    tm = max(tm_align, (tm // tm_align) * tm_align)

    # v7x has 2 TensorCores: give the "parallel" batch axis >= 2 grid steps
    # when the batch allows (harmless extra step on single-TC v5e/v6e).
    if _round_up(B, tm) // tm < 2 and tm > tm_align:
        tm = max(tm_align, _round_up((B + 1) // 2, tm_align))

    B_p = _round_up(B, tm)
    grid = (B_p // tm,)

    needed = w_bytes + b_bytes + tm * per_row
    assert needed <= int(0.85 * vmem_cap), (
        f"VMEM footprint {needed} exceeds 85% of capacity {vmem_cap}")
    vmem_limit = int(min(0.9 * vmem_cap,
                         max(32 * 1024 * 1024, 1.25 * needed + (4 << 20))))

    # ---- one-time glue: transpose weights to [in, out], zero-pad, cast -----
    def pad_wT(w, rows, cols):
        wt = w.T                                    # [in, out] (K-major, N on lanes)
        return jnp.pad(wt, ((0, rows - wt.shape[0]),
                            (0, cols - wt.shape[1]))).astype(compute_dtype)

    def pad_b(b, cols):
        return jnp.pad(b, (0, cols - b.shape[0])
                       ).astype(jnp.float32).reshape(1, cols)

    w1 = pad_wT(params["w1"], in_p, out_p)
    w2 = pad_wT(params["w2"], out_p, out_p)
    w3 = pad_wT(params["w3"], out_p, out_p)
    w4 = pad_wT(params["w4"], out_p, out_p)
    b1 = pad_b(params["b1"], out_p)
    b2 = pad_b(params["b2"], out_p)
    b3 = pad_b(params["b3"], out_p)
    b4 = pad_b(params["b4"], out_p)
    x_p = jnp.pad(x, ((0, B_p - B), (0, in_p - in_size))).astype(compute_dtype)

    # ---- cost estimate for XLA's scheduler ---------------------------------
    flops = 2 * B_p * (in_p * out_p + 3 * out_p * out_p)
    bytes_accessed = (B_p * in_p * csize
                      + (in_p * out_p + 3 * out_p * out_p) * csize
                      + 4 * out_p * 4
                      + B_p * out_p * osize)
    cost = pl.CostEstimate(flops=flops, transcendentals=0,
                           bytes_accessed=bytes_accessed)

    def const_spec(shape):
        # Same block for every grid step (weights / biases) -> single-buffer.
        idx = lambda i: (0, 0)
        if single_buffer_weights:
            return pl.BlockSpec(shape, idx, pipeline_mode=pl.Buffered(1))
        return pl.BlockSpec(shape, idx)

    out = pl.pallas_call(
        linear4_kernel,
        out_shape=jax.ShapeDtypeStruct((B_p, out_p), out_dtype),
        grid_spec=pltpu.PrefetchScalarGridSpec(
            num_scalar_prefetch=0,
            grid=grid,
            in_specs=[
                pl.BlockSpec((tm, in_p), lambda i: (i, 0)),           # x tile
                const_spec((in_p, out_p)),  const_spec((1, out_p)),   # lin1
                const_spec((out_p, out_p)), const_spec((1, out_p)),   # lin2
                const_spec((out_p, out_p)), const_spec((1, out_p)),   # lin3
                const_spec((out_p, out_p)), const_spec((1, out_p)),   # lin4
            ],
            out_specs=pl.BlockSpec((tm, out_p), lambda i: (i, 0)),
            scratch_shapes=[pltpu.VMEM((tm, out_p), compute_dtype)],
        ),
        compiler_params=pltpu.CompilerParams(
            dimension_semantics=("parallel",),      # v7x: shard batch across TCs
            vmem_limit_bytes=vmem_limit),
        cost_estimate=cost,
    )(x_p, w1, b1, w2, b2, w3, b3, w4, b4)

    return out[:B, :out_size]


def init_params(key, in_size, out_size):
    """Deterministic synthetic init (torch-Linear shapes: W [out,in], b [out])."""
    ks = jax.random.split(key, 8)

    def uniform(k, shape, fan_in):
        bound = 1.0 / jnp.sqrt(fan_in)
        return jax.random.uniform(k, shape, jnp.float32, -bound, bound)

    return {
        "w1": uniform(ks[0], (out_size, in_size), in_size),
        "b1": uniform(ks[1], (out_size,), in_size),
        "w2": uniform(ks[2], (out_size, out_size), out_size),
        "b2": uniform(ks[3], (out_size,), out_size),
        "w3": uniform(ks[4], (out_size, out_size), out_size),
        "b3": uniform(ks[5], (out_size,), out_size),
        "w4": uniform(ks[6], (out_size, out_size), out_size),
        "b4": uniform(ks[7], (out_size,), out_size),
    }


def linear4_ref(x, p):
    """Pure-JAX f32 reference mirroring torch semantics (x @ W.T + b, chained)."""
    h = x @ p["w1"].T + p["b1"]
    h = h @ p["w2"].T + p["b2"]
    h = h @ p["w3"].T + p["b3"]
    h = h @ p["w4"].T + p["b4"]
    return h


if __name__ == "__main__":
    key = jax.random.PRNGKey(0)
    k_x, k_p = jax.random.split(key)

    # Small demo shapes that still exercise padding + a multi-step batch grid:
    # ragged batch (200 -> >=2 grid steps) and non-128 feature dims
    # (32 / 48 -> padded to 128 lanes).
    B, in_size, out_size = 200, 32, 48
    x = jax.random.normal(k_x, (B, in_size), jnp.float32)
    params = init_params(k_p, in_size, out_size)

    try:
        out = jax.block_until_ready(linear4(x, params))
    except (TypeError, pltpu.LoweringException):
        # Fallback only for JAX versions without per-BlockSpec buffer counts
        # (pipeline_mode=pl.Buffered(1)); reverts to default double-buffered
        # weight BlockSpecs, everything else identical.
        out = jax.block_until_ready(
            linear4(x, params, single_buffer_weights=False))

    ref = linear4_ref(x, params)
    assert out.shape == (B, out_size)
    # bf16 matmul inputs with f32 accumulation -> loosened tolerance vs f32 ref.
    assert jnp.allclose(out, ref, atol=5e-2, rtol=5e-2), "mismatch vs reference"

    print("KERNEL_OK")
</pallas_src>

<mosaic_0001>
module attributes {stable_mosaic.version = 11 : i64} {
  func.func @linear4_kernel(%arg0: i32, %arg1: memref<112x128xbf16, #tpu.memory_space<vmem>>, %arg2: memref<128x128xbf16, #tpu.memory_space<vmem>>, %arg3: memref<1x128xf32, #tpu.memory_space<vmem>>, %arg4: memref<128x128xbf16, #tpu.memory_space<vmem>>, %arg5: memref<1x128xf32, #tpu.memory_space<vmem>>, %arg6: memref<128x128xbf16, #tpu.memory_space<vmem>>, %arg7: memref<1x128xf32, #tpu.memory_space<vmem>>, %arg8: memref<128x128xbf16, #tpu.memory_space<vmem>>, %arg9: memref<1x128xf32, #tpu.memory_space<vmem>>, %arg10: memref<112x128xf32, #tpu.memory_space<vmem>>, %arg11: memref<112x128xbf16, #tpu.memory_space<vmem>>) attributes {dimension_semantics = [#tpu.dimension_semantics<parallel>], iteration_bounds = array<i64: 2>, scalar_prefetch = 0 : i64, scratch_operands = 1 : i64, tpu.core_type = #tpu.core_type<tc>, window_params = [{transform_indices = @transform_0, window_bounds = array<i64: 112, 128>}, {pipeline_mode = #tpu.pipeline_mode<synchronous>, transform_indices = @transform_1, window_bounds = array<i64: 128, 128>}, {pipeline_mode = #tpu.pipeline_mode<synchronous>, transform_indices = @transform_2, window_bounds = array<i64: 1, 128>}, {pipeline_mode = #tpu.pipeline_mode<synchronous>, transform_indices = @transform_3, window_bounds = array<i64: 128, 128>}, {pipeline_mode = #tpu.pipeline_mode<synchronous>, transform_indices = @transform_4, window_bounds = array<i64: 1, 128>}, {pipeline_mode = #tpu.pipeline_mode<synchronous>, transform_indices = @transform_5, window_bounds = array<i64: 128, 128>}, {pipeline_mode = #tpu.pipeline_mode<synchronous>, transform_indices = @transform_6, window_bounds = array<i64: 1, 128>}, {pipeline_mode = #tpu.pipeline_mode<synchronous>, transform_indices = @transform_7, window_bounds = array<i64: 128, 128>}, {pipeline_mode = #tpu.pipeline_mode<synchronous>, transform_indices = @transform_8, window_bounds = array<i64: 1, 128>}, {transform_indices = @transform_9, window_bounds = array<i64: 112, 128>}]} {
    %c0 = arith.constant 0 : index
    %c0_0 = arith.constant 0 : index
    %0 = vector.load %arg1[%c0, %c0_0] : memref<112x128xbf16, #tpu.memory_space<vmem>>, vector<112x128xbf16>
    %c0_1 = arith.constant 0 : index
    %c0_2 = arith.constant 0 : index
    %1 = vector.load %arg2[%c0_1, %c0_2] : memref<128x128xbf16, #tpu.memory_space<vmem>>, vector<128x128xbf16>
    %cst = arith.constant dense<0.000000e+00> : vector<112x128xf32>
    %2 = tpu.matmul %0, %1, %cst {dimension_numbers = #tpu.dot_dimension_numbers<[1], [0], [0], [1], [0, 0, 1, 1], [], []>} : vector<112x128xbf16>, vector<128x128xbf16>, vector<112x128xf32> -> vector<112x128xf32>
    %c0_3 = arith.constant 0 : index
    %c0_4 = arith.constant 0 : index
    %3 = vector.load %arg3[%c0_3, %c0_4] : memref<1x128xf32, #tpu.memory_space<vmem>>, vector<1x128xf32>
    %4 = vector.broadcast %3 : vector<1x128xf32> to vector<112x128xf32>
    %5 = arith.addf %2, %4 : vector<112x128xf32>
    %6 = arith.truncf %5 : vector<112x128xf32> to vector<112x128xbf16>
    %c0_5 = arith.constant 0 : index
    %c0_6 = arith.constant 0 : index
    %7 = vector.load %arg11[%c0_5, %c0_6] : memref<112x128xbf16, #tpu.memory_space<vmem>>, vector<112x128xbf16>
    tpu.vector_store %arg11[%c0_5, %c0_6], %6 {strides = array<i32>} : memref<112x128xbf16, #tpu.memory_space<vmem>>, vector<112x128xbf16>,
    %c0_7 = arith.constant 0 : index
    %c0_8 = arith.constant 0 : index
    %8 = vector.load %arg11[%c0_7, %c0_8] : memref<112x128xbf16, #tpu.memory_space<vmem>>, vector<112x128xbf16>
    %c0_9 = arith.constant 0 : index
    %c0_10 = arith.constant 0 : index
    %9 = vector.load %arg4[%c0_9, %c0_10] : memref<128x128xbf16, #tpu.memory_space<vmem>>, vector<128x128xbf16>
    %cst_11 = arith.constant dense<0.000000e+00> : vector<112x128xf32>
    %10 = tpu.matmul %8, %9, %cst_11 {dimension_numbers = #tpu.dot_dimension_numbers<[1], [0], [0], [1], [0, 0, 1, 1], [], []>} : vector<112x128xbf16>, vector<128x128xbf16>, vector<112x128xf32> -> vector<112x128xf32>
    %c0_12 = arith.constant 0 : index
    %c0_13 = arith.constant 0 : index
    %11 = vector.load %arg5[%c0_12, %c0_13] : memref<1x128xf32, #tpu.memory_space<vmem>>, vector<1x128xf32>
    %12 = vector.broadcast %11 : vector<1x128xf32> to vector<112x128xf32>
    %13 = arith.addf %10, %12 : vector<112x128xf32>
    %14 = arith.truncf %13 : vector<112x128xf32> to vector<112x128xbf16>
    %c0_14 = arith.constant 0 : index
    %c0_15 = arith.constant 0 : index
    %15 = vector.load %arg11[%c0_14, %c0_15] : memref<112x128xbf16, #tpu.memory_space<vmem>>, vector<112x128xbf16>
    tpu.vector_store %arg11[%c0_14, %c0_15], %14 {strides = array<i32>} : memref<112x128xbf16, #tpu.memory_space<vmem>>, vector<112x128xbf16>,
    %c0_16 = arith.constant 0 : index
    %c0_17 = arith.constant 0 : index
    %16 = vector.load %arg11[%c0_16, %c0_17] : memref<112x128xbf16, #tpu.memory_space<vmem>>, vector<112x128xbf16>
    %c0_18 = arith.constant 0 : index
    %c0_19 = arith.constant 0 : index
    %17 = vector.load %arg6[%c0_18, %c0_19] : memref<128x128xbf16, #tpu.memory_space<vmem>>, vector<128x128xbf16>
    %cst_20 = arith.constant dense<0.000000e+00> : vector<112x128xf32>
    %18 = tpu.matmul %16, %17, %cst_20 {dimension_numbers = #tpu.dot_dimension_numbers<[1], [0], [0], [1], [0, 0, 1, 1], [], []>} : vector<112x128xbf16>, vector<128x128xbf16>, vector<112x128xf32> -> vector<112x128xf32>
    %c0_21 = arith.constant 0 : index
    %c0_22 = arith.constant 0 : index
    %19 = vector.load %arg7[%c0_21, %c0_22] : memref<1x128xf32, #tpu.memory_space<vmem>>, vector<1x128xf32>
    %20 = vector.broadcast %19 : vector<1x128xf32> to vector<112x128xf32>
    %21 = arith.addf %18, %20 : vector<112x128xf32>
    %22 = arith.truncf %21 : vector<112x128xf32> to vector<112x128xbf16>
    %c0_23 = arith.constant 0 : index
    %c0_24 = arith.constant 0 : index
    %23 = vector.load %arg11[%c0_23, %c0_24] : memref<112x128xbf16, #tpu.memory_space<vmem>>, vector<112x128xbf16>
    tpu.vector_store %arg11[%c0_23, %c0_24], %22 {strides = array<i32>} : memref<112x128xbf16, #tpu.memory_space<vmem>>, vector<112x128xbf16>,
    %c0_25 = arith.constant 0 : index
    %c0_26 = arith.constant 0 : index
    %24 = vector.load %arg11[%c0_25, %c0_26] : memref<112x128xbf16, #tpu.memory_space<vmem>>, vector<112x128xbf16>
    %c0_27 = arith.constant 0 : index
    %c0_28 = arith.constant 0 : index
    %25 = vector.load %arg8[%c0_27, %c0_28] : memref<128x128xbf16, #tpu.memory_space<vmem>>, vector<128x128xbf16>
    %cst_29 = arith.constant dense<0.000000e+00> : vector<112x128xf32>
    %26 = tpu.matmul %24, %25, %cst_29 {dimension_numbers = #tpu.dot_dimension_numbers<[1], [0], [0], [1], [0, 0, 1, 1], [], []>} : vector<112x128xbf16>, vector<128x128xbf16>, vector<112x128xf32> -> vector<112x128xf32>
    %c0_30 = arith.constant 0 : index
    %c0_31 = arith.constant 0 : index
    %27 = vector.load %arg9[%c0_30, %c0_31] : memref<1x128xf32, #tpu.memory_space<vmem>>, vector<1x128xf32>
    %28 = vector.broadcast %27 : vector<1x128xf32> to vector<112x128xf32>
    %29 = arith.addf %26, %28 : vector<112x128xf32>
    %c0_32 = arith.constant 0 : index
    %c0_33 = arith.constant 0 : index
    %30 = vector.load %arg10[%c0_32, %c0_33] : memref<112x128xf32, #tpu.memory_space<vmem>>, vector<112x128xf32>
    tpu.vector_store %arg10[%c0_32, %c0_33], %29 {strides = array<i32>} : memref<112x128xf32, #tpu.memory_space<vmem>>, vector<112x128xf32>,
    return
  }
  func.func @transform_0(%arg0: i32) -> (i32, i32) {
    %c0_i32 = arith.constant 0 : i32
    %c0_i32_0 = arith.constant 0 : i32
    return %arg0, %c0_i32 : i32, i32
  }
  func.func @transform_1(%arg0: i32) -> (i32, i32) {
    %c0_i32 = arith.constant 0 : i32
    %c0_i32_0 = arith.constant 0 : i32
    %c0_i32_1 = arith.constant 0 : i32
    return %c0_i32, %c0_i32_0 : i32, i32
  }
  func.func @transform_2(%arg0: i32) -> (i32, i32) {
    %c0_i32 = arith.constant 0 : i32
    %c0_i32_0 = arith.constant 0 : i32
    %c0_i32_1 = arith.constant 0 : i32
    return %c0_i32, %c0_i32_0 : i32, i32
  }
  func.func @transform_3(%arg0: i32) -> (i32, i32) {
    %c0_i32 = arith.constant 0 : i32
    %c0_i32_0 = arith.constant 0 : i32
    %c0_i32_1 = arith.constant 0 : i32
    return %c0_i32, %c0_i32_0 : i32, i32
  }
  func.func @transform_4(%arg0: i32) -> (i32, i32) {
    %c0_i32 = arith.constant 0 : i32
    %c0_i32_0 = arith.constant 0 : i32
    %c0_i32_1 = arith.constant 0 : i32
    return %c0_i32, %c0_i32_0 : i32, i32
  }
  func.func @transform_5(%arg0: i32) -> (i32, i32) {
    %c0_i32 = arith.constant 0 : i32
    %c0_i32_0 = arith.constant 0 : i32
    %c0_i32_1 = arith.constant 0 : i32
    return %c0_i32, %c0_i32_0 : i32, i32
  }
  func.func @transform_6(%arg0: i32) -> (i32, i32) {
    %c0_i32 = arith.constant 0 : i32
    %c0_i32_0 = arith.constant 0 : i32
    %c0_i32_1 = arith.constant 0 : i32
    return %c0_i32, %c0_i32_0 : i32, i32
  }
  func.func @transform_7(%arg0: i32) -> (i32, i32) {
    %c0_i32 = arith.constant 0 : i32
    %c0_i32_0 = arith.constant 0 : i32
    %c0_i32_1 = arith.constant 0 : i32
    return %c0_i32, %c0_i32_0 : i32, i32
  }
  func.func @transform_8(%arg0: i32) -> (i32, i32) {
    %c0_i32 = arith.constant 0 : i32
    %c0_i32_0 = arith.constant 0 : i32
    %c0_i32_1 = arith.constant 0 : i32
    return %c0_i32, %c0_i32_0 : i32, i32
  }
  func.func @transform_9(%arg0: i32) -> (i32, i32) {
    %c0_i32 = arith.constant 0 : i32
    %c0_i32_0 = arith.constant 0 : i32
    return %arg0, %c0_i32 : i32, i32
  }
}

</mosaic_0001>

<llo_original>
// kernel: linear4.1
$region0: #{linear4.1}
  #allocation0 [shape = 'u32[]', space=smem, size = 0x4, offset = 0x4, fixed_abs, tag = 'smem constant byte address 0x4 - core index']
  #allocation1 [shape = 'u32[144,128]{1,0:T(1,128)}', space=vmem, size = 0x12000, scoped, tag = 'internal scratch']
  #allocation2 [shape = 'bf16[112,128]{1,0:T(8,128)(2,1)}', space=vmem, size = 0x7000, scoped, tag = 'scratch operand']
  %s0 = inlined_call_operand.vmem [shape: bf16[224,128], index: 0, kind: input, shape index: {}]
  %s1 = inlined_call_operand.vmem [shape: bf16[128,128], index: 1, kind: input, shape index: {}]
  %s2 = inlined_call_operand.vmem [shape: f32[1,128], index: 2, kind: input, shape index: {}]
  %s3 = inlined_call_operand.vmem [shape: bf16[128,128], index: 3, kind: input, shape index: {}]
  %s4 = inlined_call_operand.vmem [shape: f32[1,128], index: 4, kind: input, shape index: {}]
  %s5 = inlined_call_operand.vmem [shape: bf16[128,128], index: 5, kind: input, shape index: {}]
  %s6 = inlined_call_operand.vmem [shape: f32[1,128], index: 6, kind: input, shape index: {}]
  %s7 = inlined_call_operand.vmem [shape: bf16[128,128], index: 7, kind: input, shape index: {}]
  %s8 = inlined_call_operand.vmem [shape: f32[1,128], index: 8, kind: input, shape index: {}]
  %s9 = inlined_call_operand.vmem [shape: f32[224,128], index: 9, kind: output, shape index: {}]
  %s10 = sld [smem:[#allocation0]]
  $region69: #{linear4.1} parent=0
    _
  %s12 = ssub.s32 1, %s10
  %s13 = scalar_select 0, %s12, %s10
  loop: start=0, step=1, limit=4
  $region2: #{linear4.1} parent=0 // loop_pre_header
    _
  $region3: #{linear4.1} parent=0 // loop_header
    %s15 = sphi 0, %s19
    %p16 = scmp.ge.s32.totalorder %s15, 4
    %s25 = sphi 0, %s27
    %s28 = sphi 0, %s25
    %s29 = sphi 0, %s28
    %s45 = sphi 0, %s29
    %s49 = sphi 0, %s49
    %s51 = sphi 0, %s49
    %s52 = sphi 0, %s51
    %s66 = sphi 0, %s52
    %s70 = sphi 0, %s70
    %s72 = sphi 0, %s70
    %s73 = sphi 0, %s72
    %s87 = sphi 0, %s73
    %s91 = sphi 0, %s91
    %s93 = sphi 0, %s91
    %s94 = sphi 0, %s93
    %s108 = sphi 0, %s94
    %s112 = sphi 0, %s112
    %s114 = sphi 0, %s112
    %s115 = sphi 0, %s114
    %s129 = sphi 0, %s115
    %s133 = sphi 0, %s133
    %s135 = sphi 0, %s133
    %s136 = sphi 0, %s135
    %s150 = sphi 0, %s136
    %s154 = sphi 0, %s154
    %s156 = sphi 0, %s154
    %s157 = sphi 0, %s156
    %s171 = sphi 0, %s157
    %s175 = sphi 0, %s175
    %s177 = sphi 0, %s175
    %s178 = sphi 0, %s177
    %s192 = sphi 0, %s178
    %s196 = sphi 0, %s196
    %s198 = sphi 0, %s196
    %s199 = sphi 0, %s198
    %s213 = sphi 0, %s199
    %s219 = sphi 0, %s221
    %s222 = sphi 0, %s219
    %s223 = sphi 0, %s222
    %s239 = sphi 0, %s223
  $region4: #{linear4.1} parent=0 // loop_header_branch
    %18 = sbr.rel (%p16) target = $region8
  $region5: #{linear4.1} parent=0 // loop_body
    %s20 = ssub.s32 %s15, 1
    %s21 = ssub.s32 %s15, 2
    %s22 = sadd.s32 %s15, 1
    %s23 = ssub.s32 %s15, %s22
    %p24 = scmp.eq.s32.totalorder %s23, 0
    %s26 = sadd.s32 %s25, 1
    %s27 = scalar_select %p24, %s25, %s26
    %p30 = pneg %p24
    %p31 = scmp.eq.s32.totalorder %s15, 1
    %p32 = por %p30, %p31
    %p33 = scmp.ne.s32.totalorder %s25, %s28
    %p34 = scmp.eq.s32.totalorder %s15, 0
    %p35 = por %p33, %p34
    %p36 = scmp.ne.s32.totalorder %s25, %s28
    %p37 = scmp.eq.s32.totalorder %s20, 1
    %p38 = por %p36, %p37
    %p39 = scmp.ne.s32.totalorder %s28, %s29
    %p40 = scmp.eq.s32.totalorder %s20, 0
    %p41 = por %p39, %p40
    %p42 = scmp.ne.s32.totalorder %s28, %s29
    %p43 = scmp.eq.s32.totalorder %s21, 1
    %p44 = por %p42, %p43
    %p46 = scmp.ne.s32.totalorder %s29, %s45
    %p47 = scmp.eq.s32.totalorder %s21, 0
    %p48 = por %p46, %p47
    %s50 = sadd.s32 %s49, 1
    %p53 = scmp.eq.s32.totalorder %s15, 1
    %p54 = scmp.ne.s32.totalorder %s49, %s51
    %p55 = scmp.eq.s32.totalorder %s15, 0
    %p56 = por %p54, %p55
    %p57 = scmp.ne.s32.totalorder %s49, %s51
    %p58 = scmp.eq.s32.totalorder %s20, 1
    %p59 = por %p57, %p58
    %p60 = scmp.ne.s32.totalorder %s51, %s52
    %p61 = scmp.eq.s32.totalorder %s20, 0
    %p62 = por %p60, %p61
    %p63 = scmp.ne.s32.totalorder %s51, %s52
    %p64 = scmp.eq.s32.totalorder %s21, 1
    %p65 = por %p63, %p64
    %p67 = scmp.ne.s32.totalorder %s52, %s66
    %p68 = scmp.eq.s32.totalorder %s21, 0
    %p69 = por %p67, %p68
    %s71 = sadd.s32 %s70, 1
    %p74 = scmp.eq.s32.totalorder %s15, 1
    %p75 = scmp.ne.s32.totalorder %s70, %s72
    %p76 = scmp.eq.s32.totalorder %s15, 0
    %p77 = por %p75, %p76
    %p78 = scmp.ne.s32.totalorder %s70, %s72
    %p79 = scmp.eq.s32.totalorder %s20, 1
    %p80 = por %p78, %p79
    %p81 = scmp.ne.s32.totalorder %s72, %s73
    %p82 = scmp.eq.s32.totalorder %s20, 0
    %p83 = por %p81, %p82
    %p84 = scmp.ne.s32.totalorder %s72, %s73
    %p85 = scmp.eq.s32.totalorder %s21, 1
    %p86 = por %p84, %p85
    %p88 = scmp.ne.s32.totalorder %s73, %s87
    %p89 = scmp.eq.s32.totalorder %s21, 0
    %p90 = por %p88, %p89
    %s92 = sadd.s32 %s91, 1
    %p95 = scmp.eq.s32.totalorder %s15, 1
    %p96 = scmp.ne.s32.totalorder %s91, %s93
    %p97 = scmp.eq.s32.totalorder %s15, 0
    %p98 = por %p96, %p97
    %p99 = scmp.ne.s32.totalorder %s91, %s93
    %p100 = scmp.eq.s32.totalorder %s20, 1
    %p101 = por %p99, %p100
    %p102 = scmp.ne.s32.totalorder %s93, %s94
    %p103 = scmp.eq.s32.totalorder %s20, 0
    %p104 = por %p102, %p103
    %p105 = scmp.ne.s32.totalorder %s93, %s94
    %p106 = scmp.eq.s32.totalorder %s21, 1
    %p107 = por %p105, %p106
    %p109 = scmp.ne.s32.totalorder %s94, %s108
    %p110 = scmp.eq.s32.totalorder %s21, 0
    %p111 = por %p109, %p110
    %s113 = sadd.s32 %s112, 1
    %p116 = scmp.eq.s32.totalorder %s15, 1
    %p117 = scmp.ne.s32.totalorder %s112, %s114
    %p118 = scmp.eq.s32.totalorder %s15, 0
    %p119 = por %p117, %p118
    %p120 = scmp.ne.s32.totalorder %s112, %s114
    %p121 = scmp.eq.s32.totalorder %s20, 1
    %p122 = por %p120, %p121
    %p123 = scmp.ne.s32.totalorder %s114, %s115
    %p124 = scmp.eq.s32.totalorder %s20, 0
    %p125 = por %p123, %p124
    %p126 = scmp.ne.s32.totalorder %s114, %s115
    %p127 = scmp.eq.s32.totalorder %s21, 1
    %p128 = por %p126, %p127
    %p130 = scmp.ne.s32.totalorder %s115, %s129
    %p131 = scmp.eq.s32.totalorder %s21, 0
    %p132 = por %p130, %p131
    %s134 = sadd.s32 %s133, 1
    %p137 = scmp.eq.s32.totalorder %s15, 1
    %p138 = scmp.ne.s32.totalorder %s133, %s135
    %p139 = scmp.eq.s32.totalorder %s15, 0
    %p140 = por %p138, %p139
    %p141 = scmp.ne.s32.totalorder %s133, %s135
    %p142 = scmp.eq.s32.totalorder %s20, 1
    %p143 = por %p141, %p142
    %p144 = scmp.ne.s32.totalorder %s135, %s136
    %p145 = scmp.eq.s32.totalorder %s20, 0
    %p146 = por %p144, %p145
    %p147 = scmp.ne.s32.totalorder %s135, %s136
    %p148 = scmp.eq.s32.totalorder %s21, 1
    %p149 = por %p147, %p148
    %p151 = scmp.ne.s32.totalorder %s136, %s150
    %p152 = scmp.eq.s32.totalorder %s21, 0
    %p153 = por %p151, %p152
    %s155 = sadd.s32 %s154, 1
    %p158 = scmp.eq.s32.totalorder %s15, 1
    %p159 = scmp.ne.s32.totalorder %s154, %s156
    %p160 = scmp.eq.s32.totalorder %s15, 0
    %p161 = por %p159, %p160
    %p162 = scmp.ne.s32.totalorder %s154, %s156
    %p163 = scmp.eq.s32.totalorder %s20, 1
    %p164 = por %p162, %p163
    %p165 = scmp.ne.s32.totalorder %s156, %s157
    %p166 = scmp.eq.s32.totalorder %s20, 0
    %p167 = por %p165, %p166
    %p168 = scmp.ne.s32.totalorder %s156, %s157
    %p169 = scmp.eq.s32.totalorder %s21, 1
    %p170 = por %p168, %p169
    %p172 = scmp.ne.s32.totalorder %s157, %s171
    %p173 = scmp.eq.s32.totalorder %s21, 0
    %p174 = por %p172, %p173
    %s176 = sadd.s32 %s175, 1
    %p179 = scmp.eq.s32.totalorder %s15, 1
    %p180 = scmp.ne.s32.totalorder %s175, %s177
    %p181 = scmp.eq.s32.totalorder %s15, 0
    %p182 = por %p180, %p181
    %p183 = scmp.ne.s32.totalorder %s175, %s177
    %p184 = scmp.eq.s32.totalorder %s20, 1
    %p185 = por %p183, %p184
    %p186 = scmp.ne.s32.totalorder %s177, %s178
    %p187 = scmp.eq.s32.totalorder %s20, 0
    %p188 = por %p186, %p187
    %p189 = scmp.ne.s32.totalorder %s177, %s178
    %p190 = scmp.eq.s32.totalorder %s21, 1
    %p191 = por %p189, %p190
    %p193 = scmp.ne.s32.totalorder %s178, %s192
    %p194 = scmp.eq.s32.totalorder %s21, 0
    %p195 = por %p193, %p194
    %s197 = sadd.s32 %s196, 1
    %p200 = scmp.eq.s32.totalorder %s15, 1
    %p201 = scmp.ne.s32.totalorder %s196, %s198
    %p202 = scmp.eq.s32.totalorder %s15, 0
    %p203 = por %p201, %p202
    %p204 = scmp.ne.s32.totalorder %s196, %s198
    %p205 = scmp.eq.s32.totalorder %s20, 1
    %p206 = por %p204, %p205
    %p207 = scmp.ne.s32.totalorder %s198, %s199
    %p208 = scmp.eq.s32.totalorder %s20, 0
    %p209 = por %p207, %p208
    %p210 = scmp.ne.s32.totalorder %s198, %s199
    %p211 = scmp.eq.s32.totalorder %s21, 1
    %p212 = por %p210, %p211
    %p214 = scmp.ne.s32.totalorder %s199, %s213
    %p215 = scmp.eq.s32.totalorder %s21, 0
    %p216 = por %p214, %p215
    %s217 = ssub.s32 %s15, %s22
    %p218 = scmp.eq.s32.totalorder %s217, 0
    %s220 = sadd.s32 %s219, 1
    %s221 = scalar_select %p218, %s219, %s220
    %p224 = pneg %p218
    %p225 = scmp.eq.s32.totalorder %s15, 1
    %p226 = por %p224, %p225
    %p227 = scmp.ne.s32.totalorder %s219, %s222
    %p228 = scmp.eq.s32.totalorder %s15, 0
    %p229 = por %p227, %p228
    %p230 = scmp.ne.s32.totalorder %s219, %s222
    %p231 = scmp.eq.s32.totalorder %s20, 1
    %p232 = por %p230, %p231
    %p233 = scmp.ne.s32.totalorder %s222, %s223
    %p234 = scmp.eq.s32.totalorder %s20, 0
    %p235 = por %p233, %p234
    %p236 = scmp.ne.s32.totalorder %s222, %s223
    %p237 = scmp.eq.s32.totalorder %s21, 1
    %p238 = por %p236, %p237
    %p240 = scmp.ne.s32.totalorder %s223, %s239
    %p241 = scmp.eq.s32.totalorder %s21, 0
    %p242 = por %p240, %p241
    %p243 = scmp.le.s32.totalorder 1, %s15
    %p244 = scmp.lt.s32.totalorder %s15, 3
    %p245 = pnand %p243, %p244
    %p246 = pneg %p245
    // Predicated region
    $region9: #{linear4.1} parent=5 // pred_check
      _
    $region10: #{linear4.1} parent=5 // pred_check_branch
      %248 = sbr.rel (%p245) target = $region12
    $region11: #{linear4.1} parent=5 // pred_region
      %s249 = ssub.s32 %s15, 1
      // Predicated region
      $region13: #{linear4.1} parent=11 // pred_check
        %p250 = pneg %p62
      $region14: #{linear4.1} parent=11 // pred_check_branch
        %252 = sbr.rel (%p250) target = $region16
      $region15: #{linear4.1} parent=11 // pred_region
        _
      $region16: #{linear4.1} parent=11 // pred_fallthru
        _
      // Predicated region
      $region17: #{linear4.1} parent=11 // pred_check
        %p253 = pneg %p83
      $region18: #{linear4.1} parent=11 // pred_check_branch
        %255 = sbr.rel (%p253) target = $region20
      $region19: #{linear4.1} parent=11 // pred_region
        _
      $region20: #{linear4.1} parent=11 // pred_fallthru
        _
      // Predicated region
      $region21: #{linear4.1} parent=11 // pred_check
        %p256 = pneg %p104
      $region22: #{linear4.1} parent=11 // pred_check_branch
        %258 = sbr.rel (%p256) target = $region24
      $region23: #{linear4.1} parent=11 // pred_region
        _
      $region24: #{linear4.1} parent=11 // pred_fallthru
        _
      // Predicated region
      $region25: #{linear4.1} parent=11 // pred_check
        %p259 = pneg %p125
      $region26: #{linear4.1} parent=11 // pred_check_branch
        %261 = sbr.rel (%p259) target = $region28
      $region27: #{linear4.1} parent=11 // pred_region
        _
      $region28: #{linear4.1} parent=11 // pred_fallthru
        _
      // Predicated region
      $region29: #{linear4.1} parent=11 // pred_check
        %p262 = pneg %p146
      $region30: #{linear4.1} parent=11 // pred_check_branch
        %264 = sbr.rel (%p262) target = $region32
      $region31: #{linear4.1} parent=11 // pred_region
        _
      $region32: #{linear4.1} parent=11 // pred_fallthru
        _
      // Predicated region
      $region33: #{linear4.1} parent=11 // pred_check
        %p265 = pneg %p167
      $region34: #{linear4.1} parent=11 // pred_check_branch
        %267 = sbr.rel (%p265) target = $region36
      $region35: #{linear4.1} parent=11 // pred_region
        _
      $region36: #{linear4.1} parent=11 // pred_fallthru
        _
      // Predicated region
      $region37: #{linear4.1} parent=11 // pred_check
        %p268 = pneg %p188
      $region38: #{linear4.1} parent=11 // pred_check_branch
        %270 = sbr.rel (%p268) target = $region40
      $region39: #{linear4.1} parent=11 // pred_region
        _
      $region40: #{linear4.1} parent=11 // pred_fallthru
        _
      // Predicated region
      $region41: #{linear4.1} parent=11 // pred_check
        %p271 = pneg %p209
      $region42: #{linear4.1} parent=11 // pred_check_branch
        %273 = sbr.rel (%p271) target = $region44
      $region43: #{linear4.1} parent=11 // pred_region
        _
      $region44: #{linear4.1} parent=11 // pred_fallthru
        _
    $region12: #{linear4.1} parent=5 // pred_fallthru
      _
    %p274 = scmp.lt.s32.totalorder %s15, 2
    // Predicated region
    $region45: #{linear4.1} parent=5 // pred_check
      %p275 = pneg %p274
    $region46: #{linear4.1} parent=5 // pred_check_branch
      %277 = sbr.rel (%p275) target = $region48
    $region47: #{linear4.1} parent=5 // pred_region
      // Predicated region
      $region49: #{linear4.1} parent=47 // pred_check
        %p278 = pneg %p35
      $region50: #{linear4.1} parent=47 // pred_check_branch
        %280 = sbr.rel (%p278) target = $region52
      $region51: #{linear4.1} parent=47 // pred_region
        %s281 = smul.u32 14, %s15
        %p282 = scmp.lt.s32.totalorder %s281, 27
        %s283 = scalar_select %p282, %s281, 27
        %s284 = smul.addr %s283, 4
        %s285 = scalar_lea.vmem %s0, %s284
        %s286 = smul.u32 14, %s15
      $region52: #{linear4.1} parent=47 // pred_fallthru
        _
    $region48: #{linear4.1} parent=5 // pred_fallthru
      _
    %p287 = scmp.le.s32.totalorder 1, %s15
    %p288 = scmp.lt.s32.totalorder %s15, 3
    %p289 = pnand %p287, %p288
    %p290 = pneg %p289
    // Predicated region
    $region53: #{linear4.1} parent=5 // pred_check
      _
    $region54: #{linear4.1} parent=5 // pred_check_branch
      %292 = sbr.rel (%p289) target = $region56
    $region55: #{linear4.1} parent=5 // pred_region
      %s293 = ssub.s32 %s15, 1
      %s294 = smul.u32 14, %s20
      %p295 = scmp.lt.s32.totalorder %s294, 27
      %s296 = scalar_select %p295, %s294, 27
      %s297 = smul.addr %s296, 4
      %s298 = scalar_lea.vmem %s0, %s297
      %p299 = pneg %p41
      %p300 = pneg %p38
      %p301 = pneg %p62
      %p302 = pneg %p59
      %p303 = pneg %p83
      %p304 = pneg %p80
      %p305 = pneg %p104
      %p306 = pneg %p101
      %p307 = pneg %p125
      %p308 = pneg %p122
      %p309 = pneg %p146
      %p310 = pneg %p143
      %p311 = pneg %p167
      %p312 = pneg %p164
      %p313 = pneg %p188
      %p314 = pneg %p185
      %p315 = pneg %p209
      %p316 = pneg %p206
      %p317 = pneg %p235
      %p318 = pneg %p232
      %s319 = smul.u32 14, %s20
      %p320 = scmp.lt.s32.totalorder %s319, 27
      %s321 = scalar_select %p320, %s319, 27
      %s322 = smul.addr %s321, 8
      %s323 = scalar_lea.vmem %s9, %s322
      %s324 = smul.u32 14, %s20
      %p325 = scmp.lt.s32.totalorder %s324, 27
      %s326 = scalar_select %p325, %s324, 27
      %s327 = smul.addr %s326, 4
      %s328 = scalar_lea.vmem %s0, %s327
      %s329 = smul.u32 14, %s20
      %s330 = smul.u32 14, %s20
      %p331 = scmp.lt.s32.totalorder %s330, 27
      %s332 = scalar_select %p331, %s330, 27
      %s333 = smul.addr %s332, 8
      %s334 = scalar_lea.vmem %s9, %s333
      %s335 = smul.u32 14, %s20
      %v337 = vld [vmem:[%s328] sm:$0xf]
      %v338 = vld [vmem:[%s328 + $0x4] sm:$0xf]
      %v339 = vld [vmem:[%s328 + $0x8] sm:$0xf]
      %v340 = vld [vmem:[%s328 + $0xc] sm:$0xf]
      %v341 = vld [vmem:[%s328 + $0x10] sm:$0xf]
      %v342 = vld [vmem:[%s328 + $0x14] sm:$0xf]
      %v343 = vld [vmem:[%s328 + $0x18] sm:$0xf]
      %v344 = vld [vmem:[%s328 + $0x1c] sm:$0xf]
      %v345 = vld [vmem:[%s328 + $0x20] sm:$0xf]
      %v346 = vld [vmem:[%s328 + $0x24] sm:$0xf]
      %v347 = vld [vmem:[%s328 + $0x28] sm:$0xf]
      %v348 = vld [vmem:[%s328 + $0x2c] sm:$0xf]
      %v349 = vld [vmem:[%s328 + $0x30] sm:$0xf]
      %v350 = vld [vmem:[%s328 + $0x34] sm:$0xf]
      %v351 = vld [vmem:[%s1] sm:$0xf]
      %v352 = vld [vmem:[%s1 + $0x4] sm:$0xf]
      %v353 = vld [vmem:[%s1 + $0x8] sm:$0xf]
      %v354 = vld [vmem:[%s1 + $0xc] sm:$0xf]
      %v355 = vld [vmem:[%s1 + $0x10] sm:$0xf]
      %v356 = vld [vmem:[%s1 + $0x14] sm:$0xf]
      %v357 = vld [vmem:[%s1 + $0x18] sm:$0xf]
      %v358 = vld [vmem:[%s1 + $0x1c] sm:$0xf]
      %v359 = vld [vmem:[%s1 + $0x20] sm:$0xf]
      %v360 = vld [vmem:[%s1 + $0x24] sm:$0xf]
      %v361 = vld [vmem:[%s1 + $0x28] sm:$0xf]
      %v362 = vld [vmem:[%s1 + $0x2c] sm:$0xf]
      %v363 = vld [vmem:[%s1 + $0x30] sm:$0xf]
      %v364 = vld [vmem:[%s1 + $0x34] sm:$0xf]
      %v365 = vld [vmem:[%s1 + $0x38] sm:$0xf]
      %v366 = vld [vmem:[%s1 + $0x3c] sm:$0xf]
      %v367 = vld [vmem:[%s2] sm:$0x1]
      %v369 = vlaneseq
      %v370 = vshrl.u32 %v369, 7
      %v371 = vsub.s32 0, %v370
      %v372 = vrot.slane %v367, %v371
      %v388 = vunpack.c.l.b16 %v337
      %v389 = vunpack.c.l.b16 %v338
      %v390 = vunpack.c.l.b16 %v339
      %v391 = vunpack.c.l.b16 %v340
      %v392 = vunpack.c.l.b16 %v341
      %v393 = vunpack.c.l.b16 %v342
      %v394 = vunpack.c.l.b16 %v343
      %v395 = vunpack.c.l.b16 %v344
      %v396 = vunpack.c.l.b16 %v345
      %v397 = vunpack.c.l.b16 %v346
      %v398 = vunpack.c.l.b16 %v347
      %v399 = vunpack.c.l.b16 %v348
      %v400 = vunpack.c.l.b16 %v349
      %v401 = vunpack.c.l.b16 %v350
      %v402 = vpack.c.b16 %v389, %v388
      %v403 = vpack.c.b16 %v391, %v390
      %v404 = vpack.c.b16 %v393, %v392
      %v405 = vpack.c.b16 %v395, %v394
      %v406 = vpack.c.b16 %v397, %v396
      %v407 = vpack.c.b16 %v399, %v398
      %v408 = vpack.c.b16 %v401, %v400
      %v432 = vunpack.c.l.b16 %v351
      %v433 = vunpack.c.l.b16 %v352
      %v434 = vunpack.c.l.b16 %v353
      %v435 = vunpack.c.l.b16 %v354
      %v436 = vunpack.c.l.b16 %v355
      %v437 = vunpack.c.l.b16 %v356
      %v438 = vunpack.c.l.b16 %v357
      %v439 = vunpack.c.l.b16 %v358
      %v440 = vunpack.c.l.b16 %v359
      %v441 = vunpack.c.l.b16 %v360
      %v442 = vunpack.c.l.b16 %v361
      %v443 = vunpack.c.l.b16 %v362
      %v444 = vunpack.c.l.b16 %v363
      %v445 = vunpack.c.l.b16 %v364
      %v446 = vunpack.c.l.b16 %v365
      %v447 = vunpack.c.l.b16 %v366
      %v448 = vpack.c.b16 %v433, %v432
      %v449 = vpack.c.b16 %v435, %v434
      %v450 = vpack.c.b16 %v437, %v436
      %v451 = vpack.c.b16 %v439, %v438
      %v452 = vpack.c.b16 %v441, %v440
      %v453 = vpack.c.b16 %v443, %v442
      %v454 = vpack.c.b16 %v445, %v444
      %v455 = vpack.c.b16 %v447, %v446
      %464 = vmatprep.subr.bf16.mxu0 0
      %465 = vmatpush1.bf16.msra.mxu0 %v455
      %466 = vmatprep.subr.bf16.mxu0 0
      %467 = vmatpush1.bf16.msra.mxu0 %v454
      %468 = vmatprep.subr.bf16.mxu0 0
      %469 = vmatpush1.bf16.msra.mxu0 %v453
      %470 = vmatprep.subr.bf16.mxu0 0
      %471 = vmatpush1.bf16.msra.mxu0 %v452
      %472 = vmatprep.subr.bf16.mxu0 0
      %473 = vmatpush1.bf16.msra.mxu0 %v451
      %474 = vmatprep.subr.bf16.mxu0 0
      %475 = vmatpush1.bf16.msra.mxu0 %v450
      %476 = vmatprep.subr.bf16.mxu0 0
      %477 = vmatpush1.bf16.msra.mxu0 %v449
      %478 = vmatprep.subr.bf16.mxu0 0
      %479 = vmatpush1.bf16.msra.mxu0 %v448
      %480 = vmatprep.subr.bf16.mxu0 0
      %481 = vmatpush2.bf16.msra.mxu0 0
      %482 = vmatprep.subr.bf16.mxu0 0
      %483 = vmatpush2.bf16.msra.mxu0 0
      %484 = vmatprep.subr.bf16.mxu0 0
      %485 = vmatpush2.bf16.msra.mxu0 0
      %486 = vmatprep.subr.bf16.mxu0 0
      %487 = vmatpush2.bf16.msra.mxu0 0
      %488 = vmatprep.subr.bf16.mxu0 0
      %489 = vmatpush2.bf16.msra.mxu0 0
      %490 = vmatprep.subr.bf16.mxu0 0
      %491 = vmatpush2.bf16.msra.mxu0 0
      %492 = vmatprep.subr.bf16.mxu0 0
      %493 = vmatpush2.bf16.msra.mxu0 0
      %494 = vmatprep.subr.bf16.mxu0 0
      %495 = vmatpush2.bf16.msra.mxu0 0
      %496 = vmatprep.mubr.bf16.mxu0 0
      %497 = vmatmul.mubr.bf16.gmra.mxu0 %v402
      %v498 = vpop.f32.mrf.mxu0
      %v499 = vadd.f32 %v372, %v498
      %v500 = vpop.f32.mrf.mxu0
      %v501 = vpop.f32.mrf.mxu0
      %v502 = vadd.f32 %v372, %v501
      %v503 = vpop.f32.mrf.mxu0
      %504 = vmatprep.mubr.bf16.mxu0 0
      %505 = vmatmul.mubr.bf16.gmra.mxu0 %v403
      %v506 = vpop.f32.mrf.mxu0
      %v507 = vadd.f32 %v372, %v506
      %v508 = vpop.f32.mrf.mxu0
      %v509 = vpop.f32.mrf.mxu0
      %v510 = vadd.f32 %v372, %v509
      %v511 = vpop.f32.mrf.mxu0
      %512 = vmatprep.mubr.bf16.mxu0 0
      %513 = vmatmul.mubr.bf16.gmra.mxu0 %v404
      %v514 = vpop.f32.mrf.mxu0
      %v515 = vadd.f32 %v372, %v514
      %v516 = vpop.f32.mrf.mxu0
      %v517 = vpop.f32.mrf.mxu0
      %v518 = vadd.f32 %v372, %v517
      %v519 = vpop.f32.mrf.mxu0
      %520 = vmatprep.mubr.bf16.mxu0 0
      %521 = vmatmul.mubr.bf16.gmra.mxu0 %v405
      %v522 = vpop.f32.mrf.mxu0
      %v523 = vadd.f32 %v372, %v522
      %v524 = vpop.f32.mrf.mxu0
      %v525 = vpop.f32.mrf.mxu0
      %v526 = vadd.f32 %v372, %v525
      %v527 = vpop.f32.mrf.mxu0
      %528 = vmatprep.mubr.bf16.mxu0 0
      %529 = vmatmul.mubr.bf16.gmra.mxu0 %v406
      %v530 = vpop.f32.mrf.mxu0
      %v531 = vadd.f32 %v372, %v530
      %v532 = vpop.f32.mrf.mxu0
      %v533 = vpop.f32.mrf.mxu0
      %v534 = vadd.f32 %v372, %v533
      %v535 = vpop.f32.mrf.mxu0
      %536 = vmatprep.mubr.bf16.mxu0 0
      %537 = vmatmul.mubr.bf16.gmra.mxu0 %v407
      %v538 = vpop.f32.mrf.mxu0
      %v539 = vadd.f32 %v372, %v538
      %v540 = vpop.f32.mrf.mxu0
      %v541 = vpop.f32.mrf.mxu0
      %v542 = vadd.f32 %v372, %v541
      %v543 = vpop.f32.mrf.mxu0
      %544 = vmatprep.mubr.bf16.mxu0 0
      %545 = vmatmul.mubr.bf16.gmra.mxu0 %v408
      %v546 = vpop.f32.mrf.mxu0
      %v547 = vadd.f32 %v372, %v546
      %v548 = vpop.f32.mrf.mxu0
      %v549 = vpop.f32.mrf.mxu0
      %v550 = vadd.f32 %v372, %v549
      %v551 = vpop.f32.mrf.mxu0
      %552 = vdwg.mxu0
      %v553 = vpack.c.bf16 %v502, %v499
      %v554 = vpack.c.bf16 %v510, %v507
      %v555 = vpack.c.bf16 %v518, %v515
      %v556 = vpack.c.bf16 %v526, %v523
      %v557 = vpack.c.bf16 %v534, %v531
      %v558 = vpack.c.bf16 %v542, %v539
      %v559 = vpack.c.bf16 %v550, %v547
      %v567 = vunpack.c.l.b16 %v553
      %v568 = vunpack.c.h.b16 %v553
      %v569 = vunpack.c.l.b16 %v554
      %v570 = vunpack.c.h.b16 %v554
      %v571 = vunpack.c.l.b16 %v555
      %v572 = vunpack.c.h.b16 %v555
      %v573 = vunpack.c.l.b16 %v556
      %v574 = vunpack.c.h.b16 %v556
      %v575 = vunpack.c.l.b16 %v557
      %v576 = vunpack.c.h.b16 %v557
      %v577 = vunpack.c.l.b16 %v558
      %v578 = vunpack.c.h.b16 %v558
      %v579 = vunpack.c.l.b16 %v559
      %v580 = vunpack.c.h.b16 %v559
      %v581 = vpack.c.b16 %v567, %v567
      %v582 = vpack.c.b16 %v568, %v568
      %v583 = vpack.c.b16 %v569, %v569
      %v584 = vpack.c.b16 %v570, %v570
      %v585 = vpack.c.b16 %v571, %v571
      %v586 = vpack.c.b16 %v572, %v572
      %v587 = vpack.c.b16 %v573, %v573
      %v588 = vpack.c.b16 %v574, %v574
      %v589 = vpack.c.b16 %v575, %v575
      %v590 = vpack.c.b16 %v576, %v576
      %v591 = vpack.c.b16 %v577, %v577
      %v592 = vpack.c.b16 %v578, %v578
      %v593 = vpack.c.b16 %v579, %v579
      %v594 = vpack.c.b16 %v580, %v580
      %609 = vst [vmem:[#allocation2] sm:$0xf] %v581
      %610 = vst [vmem:[#allocation2 + $0x4] sm:$0xf] %v582
      %611 = vst [vmem:[#allocation2 + $0x8] sm:$0xf] %v583
      %612 = vst [vmem:[#allocation2 + $0xc] sm:$0xf] %v584
      %613 = vst [vmem:[#allocation2 + $0x10] sm:$0xf] %v585
      %614 = vst [vmem:[#allocation2 + $0x14] sm:$0xf] %v586
      %615 = vst [vmem:[#allocation2 + $0x18] sm:$0xf] %v587
      %616 = vst [vmem:[#allocation2 + $0x1c] sm:$0xf] %v588
      %617 = vst [vmem:[#allocation2 + $0x20] sm:$0xf] %v589
      %618 = vst [vmem:[#allocation2 + $0x24] sm:$0xf] %v590
      %619 = vst [vmem:[#allocation2 + $0x28] sm:$0xf] %v591
      %620 = vst [vmem:[#allocation2 + $0x2c] sm:$0xf] %v592
      %621 = vst [vmem:[#allocation2 + $0x30] sm:$0xf] %v593
      %622 = vst [vmem:[#allocation2 + $0x34] sm:$0xf] %v594
      %v623 = vld [vmem:[#allocation2] sm:$0xf]
      %v624 = vld [vmem:[#allocation2 + $0x4] sm:$0xf]
      %v625 = vld [vmem:[#allocation2 + $0x8] sm:$0xf]
      %v626 = vld [vmem:[#allocation2 + $0xc] sm:$0xf]
      %v627 = vld [vmem:[#allocation2 + $0x10] sm:$0xf]
      %v628 = vld [vmem:[#allocation2 + $0x14] sm:$0xf]
      %v629 = vld [vmem:[#allocation2 + $0x18] sm:$0xf]
      %v630 = vld [vmem:[#allocation2 + $0x1c] sm:$0xf]
      %v631 = vld [vmem:[#allocation2 + $0x20] sm:$0xf]
      %v632 = vld [vmem:[#allocation2 + $0x24] sm:$0xf]
      %v633 = vld [vmem:[#allocation2 + $0x28] sm:$0xf]
      %v634 = vld [vmem:[#allocation2 + $0x2c] sm:$0xf]
      %v635 = vld [vmem:[#allocation2 + $0x30] sm:$0xf]
      %v636 = vld [vmem:[#allocation2 + $0x34] sm:$0xf]
      %v637 = vld [vmem:[%s3] sm:$0xf]
      %v638 = vld [vmem:[%s3 + $0x4] sm:$0xf]
      %v639 = vld [vmem:[%s3 + $0x8] sm:$0xf]
      %v640 = vld [vmem:[%s3 + $0xc] sm:$0xf]
      %v641 = vld [vmem:[%s3 + $0x10] sm:$0xf]
      %v642 = vld [vmem:[%s3 + $0x14] sm:$0xf]
      %v643 = vld [vmem:[%s3 + $0x18] sm:$0xf]
      %v644 = vld [vmem:[%s3 + $0x1c] sm:$0xf]
      %v645 = vld [vmem:[%s3 + $0x20] sm:$0xf]
      %v646 = vld [vmem:[%s3 + $0x24] sm:$0xf]
      %v647 = vld [vmem:[%s3 + $0x28] sm:$0xf]
      %v648 = vld [vmem:[%s3 + $0x2c] sm:$0xf]
      %v649 = vld [vmem:[%s3 + $0x30] sm:$0xf]
      %v650 = vld [vmem:[%s3 + $0x34] sm:$0xf]
      %v651 = vld [vmem:[%s3 + $0x38] sm:$0xf]
      %v652 = vld [vmem:[%s3 + $0x3c] sm:$0xf]
      %v653 = vld [vmem:[%s4] sm:$0x1]
      %v655 = vlaneseq
      %v656 = vshrl.u32 %v655, 7
      %v657 = vsub.s32 0, %v656
      %v658 = vrot.slane %v653, %v657
      %v674 = vunpack.c.l.b16 %v623
      %v675 = vunpack.c.l.b16 %v624
      %v676 = vunpack.c.l.b16 %v625
      %v677 = vunpack.c.l.b16 %v626
      %v678 = vunpack.c.l.b16 %v627
      %v679 = vunpack.c.l.b16 %v628
      %v680 = vunpack.c.l.b16 %v629
      %v681 = vunpack.c.l.b16 %v630
      %v682 = vunpack.c.l.b16 %v631
      %v683 = vunpack.c.l.b16 %v632
      %v684 = vunpack.c.l.b16 %v633
      %v685 = vunpack.c.l.b16 %v634
      %v686 = vunpack.c.l.b16 %v635
      %v687 = vunpack.c.l.b16 %v636
      %v688 = vpack.c.b16 %v675, %v674
      %v689 = vpack.c.b16 %v677, %v676
      %v690 = vpack.c.b16 %v679, %v678
      %v691 = vpack.c.b16 %v681, %v680
      %v692 = vpack.c.b16 %v683, %v682
      %v693 = vpack.c.b16 %v685, %v684
      %v694 = vpack.c.b16 %v687, %v686
      %v718 = vunpack.c.l.b16 %v637
      %v719 = vunpack.c.l.b16 %v638
      %v720 = vunpack.c.l.b16 %v639
      %v721 = vunpack.c.l.b16 %v640
      %v722 = vunpack.c.l.b16 %v641
      %v723 = vunpack.c.l.b16 %v642
      %v724 = vunpack.c.l.b16 %v643
      %v725 = vunpack.c.l.b16 %v644
      %v726 = vunpack.c.l.b16 %v645
      %v727 = vunpack.c.l.b16 %v646
      %v728 = vunpack.c.l.b16 %v647
      %v729 = vunpack.c.l.b16 %v648
      %v730 = vunpack.c.l.b16 %v649
      %v731 = vunpack.c.l.b16 %v650
      %v732 = vunpack.c.l.b16 %v651
      %v733 = vunpack.c.l.b16 %v652
      %v734 = vpack.c.b16 %v719, %v718
      %v735 = vpack.c.b16 %v721, %v720
      %v736 = vpack.c.b16 %v723, %v722
      %v737 = vpack.c.b16 %v725, %v724
      %v738 = vpack.c.b16 %v727, %v726
      %v739 = vpack.c.b16 %v729, %v728
      %v740 = vpack.c.b16 %v731, %v730
      %v741 = vpack.c.b16 %v733, %v732
      %750 = vmatprep.subr.bf16.mxu0 0
      %751 = vmatpush1.bf16.msra.mxu0 %v741
      %752 = vmatprep.subr.bf16.mxu0 0
      %753 = vmatpush1.bf16.msra.mxu0 %v740
      %754 = vmatprep.subr.bf16.mxu0 0
      %755 = vmatpush1.bf16.msra.mxu0 %v739
      %756 = vmatprep.subr.bf16.mxu0 0
      %757 = vmatpush1.bf16.msra.mxu0 %v738
      %758 = vmatprep.subr.bf16.mxu0 0
      %759 = vmatpush1.bf16.msra.mxu0 %v737
      %760 = vmatprep.subr.bf16.mxu0 0
      %761 = vmatpush1.bf16.msra.mxu0 %v736
      %762 = vmatprep.subr.bf16.mxu0 0
      %763 = vmatpush1.bf16.msra.mxu0 %v735
      %764 = vmatprep.subr.bf16.mxu0 0
      %765 = vmatpush1.bf16.msra.mxu0 %v734
      %766 = vmatprep.subr.bf16.mxu0 0
      %767 = vmatpush2.bf16.msra.mxu0 0
      %768 = vmatprep.subr.bf16.mxu0 0
      %769 = vmatpush2.bf16.msra.mxu0 0
      %770 = vmatprep.subr.bf16.mxu0 0
      %771 = vmatpush2.bf16.msra.mxu0 0
      %772 = vmatprep.subr.bf16.mxu0 0
      %773 = vmatpush2.bf16.msra.mxu0 0
      %774 = vmatprep.subr.bf16.mxu0 0
      %775 = vmatpush2.bf16.msra.mxu0 0
      %776 = vmatprep.subr.bf16.mxu0 0
      %777 = vmatpush2.bf16.msra.mxu0 0
      %778 = vmatprep.subr.bf16.mxu0 0
      %779 = vmatpush2.bf16.msra.mxu0 0
      %780 = vmatprep.subr.bf16.mxu0 0
      %781 = vmatpush2.bf16.msra.mxu0 0
      %782 = vmatprep.mubr.bf16.mxu0 0
      %783 = vmatmul.mubr.bf16.gmra.mxu0 %v688
      %v784 = vpop.f32.mrf.mxu0
      %v785 = vadd.f32 %v658, %v784
      %v786 = vpop.f32.mrf.mxu0
      %v787 = vpop.f32.mrf.mxu0
      %v788 = vadd.f32 %v658, %v787
      %v789 = vpop.f32.mrf.mxu0
      %790 = vmatprep.mubr.bf16.mxu0 0
      %791 = vmatmul.mubr.bf16.gmra.mxu0 %v689
      %v792 = vpop.f32.mrf.mxu0
      %v793 = vadd.f32 %v658, %v792
      %v794 = vpop.f32.mrf.mxu0
      %v795 = vpop.f32.mrf.mxu0
      %v796 = vadd.f32 %v658, %v795
      %v797 = vpop.f32.mrf.mxu0
      %798 = vmatprep.mubr.bf16.mxu0 0
      %799 = vmatmul.mubr.bf16.gmra.mxu0 %v690
      %v800 = vpop.f32.mrf.mxu0
      %v801 = vadd.f32 %v658, %v800
      %v802 = vpop.f32.mrf.mxu0
      %v803 = vpop.f32.mrf.mxu0
      %v804 = vadd.f32 %v658, %v803
      %v805 = vpop.f32.mrf.mxu0
      %806 = vmatprep.mubr.bf16.mxu0 0
      %807 = vmatmul.mubr.bf16.gmra.mxu0 %v691
      %v808 = vpop.f32.mrf.mxu0
      %v809 = vadd.f32 %v658, %v808
      %v810 = vpop.f32.mrf.mxu0
      %v811 = vpop.f32.mrf.mxu0
      %v812 = vadd.f32 %v658, %v811
      %v813 = vpop.f32.mrf.mxu0
      %814 = vmatprep.mubr.bf16.mxu0 0
      %815 = vmatmul.mubr.bf16.gmra.mxu0 %v692
      %v816 = vpop.f32.mrf.mxu0
      %v817 = vadd.f32 %v658, %v816
      %v818 = vpop.f32.mrf.mxu0
      %v819 = vpop.f32.mrf.mxu0
      %v820 = vadd.f32 %v658, %v819
      %v821 = vpop.f32.mrf.mxu0
      %822 = vmatprep.mubr.bf16.mxu0 0
      %823 = vmatmul.mubr.bf16.gmra.mxu0 %v693
      %v824 = vpop.f32.mrf.mxu0
      %v825 = vadd.f32 %v658, %v824
      %v826 = vpop.f32.mrf.mxu0
      %v827 = vpop.f32.mrf.mxu0
      %v828 = vadd.f32 %v658, %v827
      %v829 = vpop.f32.mrf.mxu0
      %830 = vmatprep.mubr.bf16.mxu0 0
      %831 = vmatmul.mubr.bf16.gmra.mxu0 %v694
      %v832 = vpop.f32.mrf.mxu0
      %v833 = vadd.f32 %v658, %v832
      %v834 = vpop.f32.mrf.mxu0
      %v835 = vpop.f32.mrf.mxu0
      %v836 = vadd.f32 %v658, %v835
      %v837 = vpop.f32.mrf.mxu0
      %838 = vdwg.mxu0
      %v839 = vpack.c.bf16 %v788, %v785
      %v840 = vpack.c.bf16 %v796, %v793
      %v841 = vpack.c.bf16 %v804, %v801
      %v842 = vpack.c.bf16 %v812, %v809
      %v843 = vpack.c.bf16 %v820, %v817
      %v844 = vpack.c.bf16 %v828, %v825
      %v845 = vpack.c.bf16 %v836, %v833
      %v853 = vunpack.c.l.b16 %v839
      %v854 = vunpack.c.h.b16 %v839
      %v855 = vunpack.c.l.b16 %v840
      %v856 = vunpack.c.h.b16 %v840
      %v857 = vunpack.c.l.b16 %v841
      %v858 = vunpack.c.h.b16 %v841
      %v859 = vunpack.c.l.b16 %v842
      %v860 = vunpack.c.h.b16 %v842
      %v861 = vunpack.c.l.b16 %v843
      %v862 = vunpack.c.h.b16 %v843
      %v863 = vunpack.c.l.b16 %v844
      %v864 = vunpack.c.h.b16 %v844
      %v865 = vunpack.c.l.b16 %v845
      %v866 = vunpack.c.h.b16 %v845
      %v867 = vpack.c.b16 %v853, %v853
      %v868 = vpack.c.b16 %v854, %v854
      %v869 = vpack.c.b16 %v855, %v855
      %v870 = vpack.c.b16 %v856, %v856
      %v871 = vpack.c.b16 %v857, %v857
      %v872 = vpack.c.b16 %v858, %v858
      %v873 = vpack.c.b16 %v859, %v859
      %v874 = vpack.c.b16 %v860, %v860
      %v875 = vpack.c.b16 %v861, %v861
      %v876 = vpack.c.b16 %v862, %v862
      %v877 = vpack.c.b16 %v863, %v863
      %v878 = vpack.c.b16 %v864, %v864
      %v879 = vpack.c.b16 %v865, %v865
      %v880 = vpack.c.b16 %v866, %v866
      %895 = vst [vmem:[#allocation2] sm:$0xf] %v867
      %896 = vst [vmem:[#allocation2 + $0x4] sm:$0xf] %v868
      %897 = vst [vmem:[#allocation2 + $0x8] sm:$0xf] %v869
      %898 = vst [vmem:[#allocation2 + $0xc] sm:$0xf] %v870
      %899 = vst [vmem:[#allocation2 + $0x10] sm:$0xf] %v871
      %900 = vst [vmem:[#allocation2 + $0x14] sm:$0xf] %v872
      %901 = vst [vmem:[#allocation2 + $0x18] sm:$0xf] %v873
      %902 = vst [vmem:[#allocation2 + $0x1c] sm:$0xf] %v874
      %903 = vst [vmem:[#allocation2 + $0x20] sm:$0xf] %v875
      %904 = vst [vmem:[#allocation2 + $0x24] sm:$0xf] %v876
      %905 = vst [vmem:[#allocation2 + $0x28] sm:$0xf] %v877
      %906 = vst [vmem:[#allocation2 + $0x2c] sm:$0xf] %v878
      %907 = vst [vmem:[#allocation2 + $0x30] sm:$0xf] %v879
      %908 = vst [vmem:[#allocation2 + $0x34] sm:$0xf] %v880
      %v909 = vld [vmem:[#allocation2] sm:$0xf]
      %v910 = vld [vmem:[#allocation2 + $0x4] sm:$0xf]
      %v911 = vld [vmem:[#allocation2 + $0x8] sm:$0xf]
      %v912 = vld [vmem:[#allocation2 + $0xc] sm:$0xf]
      %v913 = vld [vmem:[#allocation2 + $0x10] sm:$0xf]
      %v914 = vld [vmem:[#allocation2 + $0x14] sm:$0xf]
      %v915 = vld [vmem:[#allocation2 + $0x18] sm:$0xf]
      %v916 = vld [vmem:[#allocation2 + $0x1c] sm:$0xf]
      %v917 = vld [vmem:[#allocation2 + $0x20] sm:$0xf]
      %v918 = vld [vmem:[#allocation2 + $0x24] sm:$0xf]
      %v919 = vld [vmem:[#allocation2 + $0x28] sm:$0xf]
      %v920 = vld [vmem:[#allocation2 + $0x2c] sm:$0xf]
      %v921 = vld [vmem:[#allocation2 + $0x30] sm:$0xf]
      %v922 = vld [vmem:[#allocation2 + $0x34] sm:$0xf]
      %v923 = vld [vmem:[%s5] sm:$0xf]
      %v924 = vld [vmem:[%s5 + $0x4] sm:$0xf]
      %v925 = vld [vmem:[%s5 + $0x8] sm:$0xf]
      %v926 = vld [vmem:[%s5 + $0xc] sm:$0xf]
      %v927 = vld [vmem:[%s5 + $0x10] sm:$0xf]
      %v928 = vld [vmem:[%s5 + $0x14] sm:$0xf]
      %v929 = vld [vmem:[%s5 + $0x18] sm:$0xf]
      %v930 = vld [vmem:[%s5 + $0x1c] sm:$0xf]
      %v931 = vld [vmem:[%s5 + $0x20] sm:$0xf]
      %v932 = vld [vmem:[%s5 + $0x24] sm:$0xf]
      %v933 = vld [vmem:[%s5 + $0x28] sm:$0xf]
      %v934 = vld [vmem:[%s5 + $0x2c] sm:$0xf]
      %v935 = vld [vmem:[%s5 + $0x30] sm:$0xf]
      %v936 = vld [vmem:[%s5 + $0x34] sm:$0xf]
      %v937 = vld [vmem:[%s5 + $0x38] sm:$0xf]
      %v938 = vld [vmem:[%s5 + $0x3c] sm:$0xf]
      %v939 = vld [vmem:[%s6] sm:$0x1]
      %v941 = vlaneseq
      %v942 = vshrl.u32 %v941, 7
      %v943 = vsub.s32 0, %v942
      %v944 = vrot.slane %v939, %v943
      %v960 = vunpack.c.l.b16 %v909
      %v961 = vunpack.c.l.b16 %v910
      %v962 = vunpack.c.l.b16 %v911
      %v963 = vunpack.c.l.b16 %v912
      %v964 = vunpack.c.l.b16 %v913
      %v965 = vunpack.c.l.b16 %v914
      %v966 = vunpack.c.l.b16 %v915
      %v967 = vunpack.c.l.b16 %v916
      %v968 = vunpack.c.l.b16 %v917
      %v969 = vunpack.c.l.b16 %v918
      %v970 = vunpack.c.l.b16 %v919
      %v971 = vunpack.c.l.b16 %v920
      %v972 = vunpack.c.l.b16 %v921
      %v973 = vunpack.c.l.b16 %v922
      %v974 = vpack.c.b16 %v961, %v960
      %v975 = vpack.c.b16 %v963, %v962
      %v976 = vpack.c.b16 %v965, %v964
      %v977 = vpack.c.b16 %v967, %v966
      %v978 = vpack.c.b16 %v969, %v968
      %v979 = vpack.c.b16 %v971, %v970
      %v980 = vpack.c.b16 %v973, %v972
      %v1004 = vunpack.c.l.b16 %v923
      %v1005 = vunpack.c.l.b16 %v924
      %v1006 = vunpack.c.l.b16 %v925
      %v1007 = vunpack.c.l.b16 %v926
      %v1008 = vunpack.c.l.b16 %v927
      %v1009 = vunpack.c.l.b16 %v928
      %v1010 = vunpack.c.l.b16 %v929
      %v1011 = vunpack.c.l.b16 %v930
      %v1012 = vunpack.c.l.b16 %v931
      %v1013 = vunpack.c.l.b16 %v932
      %v1014 = vunpack.c.l.b16 %v933
      %v1015 = vunpack.c.l.b16 %v934
      %v1016 = vunpack.c.l.b16 %v935
      %v1017 = vunpack.c.l.b16 %v936
      %v1018 = vunpack.c.l.b16 %v937
      %v1019 = vunpack.c.l.b16 %v938
      %v1020 = vpack.c.b16 %v1005, %v1004
      %v1021 = vpack.c.b16 %v1007, %v1006
      %v1022 = vpack.c.b16 %v1009, %v1008
      %v1023 = vpack.c.b16 %v1011, %v1010
      %v1024 = vpack.c.b16 %v1013, %v1012
      %v1025 = vpack.c.b16 %v1015, %v1014
      %v1026 = vpack.c.b16 %v1017, %v1016
      %v1027 = vpack.c.b16 %v1019, %v1018
      %1036 = vmatprep.subr.bf16.mxu0 0
      %1037 = vmatpush1.bf16.msra.mxu0 %v1027
      %1038 = vmatprep.subr.bf16.mxu0 0
      %1039 = vmatpush1.bf16.msra.mxu0 %v1026
      %1040 = vmatprep.subr.bf16.mxu0 0
      %1041 = vmatpush1.bf16.msra.mxu0 %v1025
      %1042 = vmatprep.subr.bf16.mxu0 0
      %1043 = vmatpush1.bf16.msra.mxu0 %v1024
      %1044 = vmatprep.subr.bf16.mxu0 0
      %1045 = vmatpush1.bf16.msra.mxu0 %v1023
      %1046 = vmatprep.subr.bf16.mxu0 0
      %1047 = vmatpush1.bf16.msra.mxu0 %v1022
      %1048 = vmatprep.subr.bf16.mxu0 0
      %1049 = vmatpush1.bf16.msra.mxu0 %v1021
      %1050 = vmatprep.subr.bf16.mxu0 0
      %1051 = vmatpush1.bf16.msra.mxu0 %v1020
      %1052 = vmatprep.subr.bf16.mxu0 0
      %1053 = vmatpush2.bf16.msra.mxu0 0
      %1054 = vmatprep.subr.bf16.mxu0 0
      %1055 = vmatpush2.bf16.msra.mxu0 0
      %1056 = vmatprep.subr.bf16.mxu0 0
      %1057 = vmatpush2.bf16.msra.mxu0 0
      %1058 = vmatprep.subr.bf16.mxu0 0
      %1059 = vmatpush2.bf16.msra.mxu0 0
      %1060 = vmatprep.subr.bf16.mxu0 0
      %1061 = vmatpush2.bf16.msra.mxu0 0
      %1062 = vmatprep.subr.bf16.mxu0 0
      %1063 = vmatpush2.bf16.msra.mxu0 0
      %1064 = vmatprep.subr.bf16.mxu0 0
      %1065 = vmatpush2.bf16.msra.mxu0 0
      %1066 = vmatprep.subr.bf16.mxu0 0
      %1067 = vmatpush2.bf16.msra.mxu0 0
      %1068 = vmatprep.mubr.bf16.mxu0 0
      %1069 = vmatmul.mubr.bf16.gmra.mxu0 %v974
      %v1070 = vpop.f32.mrf.mxu0
      %v1071 = vadd.f32 %v944, %v1070
      %v1072 = vpop.f32.mrf.mxu0
      %v1073 = vpop.f32.mrf.mxu0
      %v1074 = vadd.f32 %v944, %v1073
      %v1075 = vpop.f32.mrf.mxu0
      %1076 = vmatprep.mubr.bf16.mxu0 0
      %1077 = vmatmul.mubr.bf16.gmra.mxu0 %v975
      %v1078 = vpop.f32.mrf.mxu0
      %v1079 = vadd.f32 %v944, %v1078
      %v1080 = vpop.f32.mrf.mxu0
      %v1081 = vpop.f32.mrf.mxu0
      %v1082 = vadd.f32 %v944, %v1081
      %v1083 = vpop.f32.mrf.mxu0
      %1084 = vmatprep.mubr.bf16.mxu0 0
      %1085 = vmatmul.mubr.bf16.gmra.mxu0 %v976
      %v1086 = vpop.f32.mrf.mxu0
      %v1087 = vadd.f32 %v944, %v1086
      %v1088 = vpop.f32.mrf.mxu0
      %v1089 = vpop.f32.mrf.mxu0
      %v1090 = vadd.f32 %v944, %v1089
      %v1091 = vpop.f32.mrf.mxu0
      %1092 = vmatprep.mubr.bf16.mxu0 0
      %1093 = vmatmul.mubr.bf16.gmra.mxu0 %v977
      %v1094 = vpop.f32.mrf.mxu0
      %v1095 = vadd.f32 %v944, %v1094
      %v1096 = vpop.f32.mrf.mxu0
      %v1097 = vpop.f32.mrf.mxu0
      %v1098 = vadd.f32 %v944, %v1097
      %v1099 = vpop.f32.mrf.mxu0
      %1100 = vmatprep.mubr.bf16.mxu0 0
      %1101 = vmatmul.mubr.bf16.gmra.mxu0 %v978
      %v1102 = vpop.f32.mrf.mxu0
      %v1103 = vadd.f32 %v944, %v1102
      %v1104 = vpop.f32.mrf.mxu0
      %v1105 = vpop.f32.mrf.mxu0
      %v1106 = vadd.f32 %v944, %v1105
      %v1107 = vpop.f32.mrf.mxu0
      %1108 = vmatprep.mubr.bf16.mxu0 0
      %1109 = vmatmul.mubr.bf16.gmra.mxu0 %v979
      %v1110 = vpop.f32.mrf.mxu0
      %v1111 = vadd.f32 %v944, %v1110
      %v1112 = vpop.f32.mrf.mxu0
      %v1113 = vpop.f32.mrf.mxu0
      %v1114 = vadd.f32 %v944, %v1113
      %v1115 = vpop.f32.mrf.mxu0
      %1116 = vmatprep.mubr.bf16.mxu0 0
      %1117 = vmatmul.mubr.bf16.gmra.mxu0 %v980
      %v1118 = vpop.f32.mrf.mxu0
      %v1119 = vadd.f32 %v944, %v1118
      %v1120 = vpop.f32.mrf.mxu0
      %v1121 = vpop.f32.mrf.mxu0
      %v1122 = vadd.f32 %v944, %v1121
      %v1123 = vpop.f32.mrf.mxu0
      %1124 = vdwg.mxu0
      %v1125 = vpack.c.bf16 %v1074, %v1071
      %v1126 = vpack.c.bf16 %v1082, %v1079
      %v1127 = vpack.c.bf16 %v1090, %v1087
      %v1128 = vpack.c.bf16 %v1098, %v1095
      %v1129 = vpack.c.bf16 %v1106, %v1103
      %v1130 = vpack.c.bf16 %v1114, %v1111
      %v1131 = vpack.c.bf16 %v1122, %v1119
      %v1139 = vunpack.c.l.b16 %v1125
      %v1140 = vunpack.c.h.b16 %v1125
      %v1141 = vunpack.c.l.b16 %v1126
      %v1142 = vunpack.c.h.b16 %v1126
      %v1143 = vunpack.c.l.b16 %v1127
      %v1144 = vunpack.c.h.b16 %v1127
      %v1145 = vunpack.c.l.b16 %v1128
      %v1146 = vunpack.c.h.b16 %v1128
      %v1147 = vunpack.c.l.b16 %v1129
      %v1148 = vunpack.c.h.b16 %v1129
      %v1149 = vunpack.c.l.b16 %v1130
      %v1150 = vunpack.c.h.b16 %v1130
      %v1151 = vunpack.c.l.b16 %v1131
      %v1152 = vunpack.c.h.b16 %v1131
      %v1153 = vpack.c.b16 %v1139, %v1139
      %v1154 = vpack.c.b16 %v1140, %v1140
      %v1155 = vpack.c.b16 %v1141, %v1141
      %v1156 = vpack.c.b16 %v1142, %v1142
      %v1157 = vpack.c.b16 %v1143, %v1143
      %v1158 = vpack.c.b16 %v1144, %v1144
      %v1159 = vpack.c.b16 %v1145, %v1145
      %v1160 = vpack.c.b16 %v1146, %v1146
      %v1161 = vpack.c.b16 %v1147, %v1147
      %v1162 = vpack.c.b16 %v1148, %v1148
      %v1163 = vpack.c.b16 %v1149, %v1149
      %v1164 = vpack.c.b16 %v1150, %v1150
      %v1165 = vpack.c.b16 %v1151, %v1151
      %v1166 = vpack.c.b16 %v1152, %v1152
      %1181 = vst [vmem:[#allocation2] sm:$0xf] %v1153
      %1182 = vst [vmem:[#allocation2 + $0x4] sm:$0xf] %v1154
      %1183 = vst [vmem:[#allocation2 + $0x8] sm:$0xf] %v1155
      %1184 = vst [vmem:[#allocation2 + $0xc] sm:$0xf] %v1156
      %1185 = vst [vmem:[#allocation2 + $0x10] sm:$0xf] %v1157
      %1186 = vst [vmem:[#allocation2 + $0x14] sm:$0xf] %v1158
      %1187 = vst [vmem:[#allocation2 + $0x18] sm:$0xf] %v1159
      %1188 = vst [vmem:[#allocation2 + $0x1c] sm:$0xf] %v1160
      %1189 = vst [vmem:[#allocation2 + $0x20] sm:$0xf] %v1161
      %1190 = vst [vmem:[#allocation2 + $0x24] sm:$0xf] %v1162
      %1191 = vst [vmem:[#allocation2 + $0x28] sm:$0xf] %v1163
      %1192 = vst [vmem:[#allocation2 + $0x2c] sm:$0xf] %v1164
      %1193 = vst [vmem:[#allocation2 + $0x30] sm:$0xf] %v1165
      %1194 = vst [vmem:[#allocation2 + $0x34] sm:$0xf] %v1166
      %v1195 = vld [vmem:[#allocation2] sm:$0xf]
      %v1196 = vld [vmem:[#allocation2 + $0x4] sm:$0xf]
      %v1197 = vld [vmem:[#allocation2 + $0x8] sm:$0xf]
      %v1198 = vld [vmem:[#allocation2 + $0xc] sm:$0xf]
      %v1199 = vld [vmem:[#allocation2 + $0x10] sm:$0xf]
      %v1200 = vld [vmem:[#allocation2 + $0x14] sm:$0xf]
      %v1201 = vld [vmem:[#allocation2 + $0x18] sm:$0xf]
      %v1202 = vld [vmem:[#allocation2 + $0x1c] sm:$0xf]
      %v1203 = vld [vmem:[#allocation2 + $0x20] sm:$0xf]
      %v1204 = vld [vmem:[#allocation2 + $0x24] sm:$0xf]
      %v1205 = vld [vmem:[#allocation2 + $0x28] sm:$0xf]
      %v1206 = vld [vmem:[#allocation2 + $0x2c] sm:$0xf]
      %v1207 = vld [vmem:[#allocation2 + $0x30] sm:$0xf]
      %v1208 = vld [vmem:[#allocation2 + $0x34] sm:$0xf]
      %v1209 = vld [vmem:[%s7] sm:$0xf]
      %v1210 = vld [vmem:[%s7 + $0x4] sm:$0xf]
      %v1211 = vld [vmem:[%s7 + $0x8] sm:$0xf]
      %v1212 = vld [vmem:[%s7 + $0xc] sm:$0xf]
      %v1213 = vld [vmem:[%s7 + $0x10] sm:$0xf]
      %v1214 = vld [vmem:[%s7 + $0x14] sm:$0xf]
      %v1215 = vld [vmem:[%s7 + $0x18] sm:$0xf]
      %v1216 = vld [vmem:[%s7 + $0x1c] sm:$0xf]
      %v1217 = vld [vmem:[%s7 + $0x20] sm:$0xf]
      %v1218 = vld [vmem:[%s7 + $0x24] sm:$0xf]
      %v1219 = vld [vmem:[%s7 + $0x28] sm:$0xf]
      %v1220 = vld [vmem:[%s7 + $0x2c] sm:$0xf]
      %v1221 = vld [vmem:[%s7 + $0x30] sm:$0xf]
      %v1222 = vld [vmem:[%s7 + $0x34] sm:$0xf]
      %v1223 = vld [vmem:[%s7 + $0x38] sm:$0xf]
      %v1224 = vld [vmem:[%s7 + $0x3c] sm:$0xf]
      %v1225 = vld [vmem:[%s8] sm:$0x1]
      %v1227 = vlaneseq
      %v1228 = vshrl.u32 %v1227, 7
      %v1229 = vsub.s32 0, %v1228
      %v1230 = vrot.slane %v1225, %v1229
      %v1246 = vunpack.c.l.b16 %v1195
      %v1247 = vunpack.c.l.b16 %v1196
      %v1248 = vunpack.c.l.b16 %v1197
      %v1249 = vunpack.c.l.b16 %v1198
      %v1250 = vunpack.c.l.b16 %v1199
      %v1251 = vunpack.c.l.b16 %v1200
      %v1252 = vunpack.c.l.b16 %v1201
      %v1253 = vunpack.c.l.b16 %v1202
      %v1254 = vunpack.c.l.b16 %v1203
      %v1255 = vunpack.c.l.b16 %v1204
      %v1256 = vunpack.c.l.b16 %v1205
      %v1257 = vunpack.c.l.b16 %v1206
      %v1258 = vunpack.c.l.b16 %v1207
      %v1259 = vunpack.c.l.b16 %v1208
      %v1260 = vpack.c.b16 %v1247, %v1246
      %v1261 = vpack.c.b16 %v1249, %v1248
      %v1262 = vpack.c.b16 %v1251, %v1250
      %v1263 = vpack.c.b16 %v1253, %v1252
      %v1264 = vpack.c.b16 %v1255, %v1254
      %v1265 = vpack.c.b16 %v1257, %v1256
      %v1266 = vpack.c.b16 %v1259, %v1258
      %v1290 = vunpack.c.l.b16 %v1209
      %v1291 = vunpack.c.l.b16 %v1210
      %v1292 = vunpack.c.l.b16 %v1211
      %v1293 = vunpack.c.l.b16 %v1212
      %v1294 = vunpack.c.l.b16 %v1213
      %v1295 = vunpack.c.l.b16 %v1214
      %v1296 = vunpack.c.l.b16 %v1215
      %v1297 = vunpack.c.l.b16 %v1216
      %v1298 = vunpack.c.l.b16 %v1217
      %v1299 = vunpack.c.l.b16 %v1218
      %v1300 = vunpack.c.l.b16 %v1219
      %v1301 = vunpack.c.l.b16 %v1220
      %v1302 = vunpack.c.l.b16 %v1221
      %v1303 = vunpack.c.l.b16 %v1222
      %v1304 = vunpack.c.l.b16 %v1223
      %v1305 = vunpack.c.l.b16 %v1224
      %v1306 = vpack.c.b16 %v1291, %v1290
      %v1307 = vpack.c.b16 %v1293, %v1292
      %v1308 = vpack.c.b16 %v1295, %v1294
      %v1309 = vpack.c.b16 %v1297, %v1296
      %v1310 = vpack.c.b16 %v1299, %v1298
      %v1311 = vpack.c.b16 %v1301, %v1300
      %v1312 = vpack.c.b16 %v1303, %v1302
      %v1313 = vpack.c.b16 %v1305, %v1304
      %1322 = vmatprep.subr.bf16.mxu0 0
      %1323 = vmatpush1.bf16.msra.mxu0 %v1313
      %1324 = vmatprep.subr.bf16.mxu0 0
      %1325 = vmatpush1.bf16.msra.mxu0 %v1312
      %1326 = vmatprep.subr.bf16.mxu0 0
      %1327 = vmatpush1.bf16.msra.mxu0 %v1311
      %1328 = vmatprep.subr.bf16.mxu0 0
      %1329 = vmatpush1.bf16.msra.mxu0 %v1310
      %1330 = vmatprep.subr.bf16.mxu0 0
      %1331 = vmatpush1.bf16.msra.mxu0 %v1309
      %1332 = vmatprep.subr.bf16.mxu0 0
      %1333 = vmatpush1.bf16.msra.mxu0 %v1308
      %1334 = vmatprep.subr.bf16.mxu0 0
      %1335 = vmatpush1.bf16.msra.mxu0 %v1307
      %1336 = vmatprep.subr.bf16.mxu0 0
      %1337 = vmatpush1.bf16.msra.mxu0 %v1306
      %1338 = vmatprep.subr.bf16.mxu0 0
      %1339 = vmatpush2.bf16.msra.mxu0 0
      %1340 = vmatprep.subr.bf16.mxu0 0
      %1341 = vmatpush2.bf16.msra.mxu0 0
      %1342 = vmatprep.subr.bf16.mxu0 0
      %1343 = vmatpush2.bf16.msra.mxu0 0
      %1344 = vmatprep.subr.bf16.mxu0 0
      %1345 = vmatpush2.bf16.msra.mxu0 0
      %1346 = vmatprep.subr.bf16.mxu0 0
      %1347 = vmatpush2.bf16.msra.mxu0 0
      %1348 = vmatprep.subr.bf16.mxu0 0
      %1349 = vmatpush2.bf16.msra.mxu0 0
      %1350 = vmatprep.subr.bf16.mxu0 0
      %1351 = vmatpush2.bf16.msra.mxu0 0
      %1352 = vmatprep.subr.bf16.mxu0 0
      %1353 = vmatpush2.bf16.msra.mxu0 0
      %1354 = vmatprep.mubr.bf16.mxu0 0
      %1355 = vmatmul.mubr.bf16.gmra.mxu0 %v1260
      %v1356 = vpop.f32.mrf.mxu0
      %v1357 = vadd.f32 %v1230, %v1356
      %v1358 = vpop.f32.mrf.mxu0
      %v1359 = vpop.f32.mrf.mxu0
      %v1360 = vadd.f32 %v1230, %v1359
      %v1361 = vpop.f32.mrf.mxu0
      %1362 = vmatprep.mubr.bf16.mxu0 0
      %1363 = vmatmul.mubr.bf16.gmra.mxu0 %v1261
      %v1364 = vpop.f32.mrf.mxu0
      %v1365 = vadd.f32 %v1230, %v1364
      %v1366 = vpop.f32.mrf.mxu0
      %v1367 = vpop.f32.mrf.mxu0
      %v1368 = vadd.f32 %v1230, %v1367
      %v1369 = vpop.f32.mrf.mxu0
      %1370 = vmatprep.mubr.bf16.mxu0 0
      %1371 = vmatmul.mubr.bf16.gmra.mxu0 %v1262
      %v1372 = vpop.f32.mrf.mxu0
      %v1373 = vadd.f32 %v1230, %v1372
      %v1374 = vpop.f32.mrf.mxu0
      %v1375 = vpop.f32.mrf.mxu0
      %v1376 = vadd.f32 %v1230, %v1375
      %v1377 = vpop.f32.mrf.mxu0
      %1378 = vmatprep.mubr.bf16.mxu0 0
      %1379 = vmatmul.mubr.bf16.gmra.mxu0 %v1263
      %v1380 = vpop.f32.mrf.mxu0
      %v1381 = vadd.f32 %v1230, %v1380
      %v1382 = vpop.f32.mrf.mxu0
      %v1383 = vpop.f32.mrf.mxu0
      %v1384 = vadd.f32 %v1230, %v1383
      %v1385 = vpop.f32.mrf.mxu0
      %1386 = vmatprep.mubr.bf16.mxu0 0
      %1387 = vmatmul.mubr.bf16.gmra.mxu0 %v1264
      %v1388 = vpop.f32.mrf.mxu0
      %v1389 = vadd.f32 %v1230, %v1388
      %v1390 = vpop.f32.mrf.mxu0
      %v1391 = vpop.f32.mrf.mxu0
      %v1392 = vadd.f32 %v1230, %v1391
      %v1393 = vpop.f32.mrf.mxu0
      %1394 = vmatprep.mubr.bf16.mxu0 0
      %1395 = vmatmul.mubr.bf16.gmra.mxu0 %v1265
      %v1396 = vpop.f32.mrf.mxu0
      %v1397 = vadd.f32 %v1230, %v1396
      %v1398 = vpop.f32.mrf.mxu0
      %v1399 = vpop.f32.mrf.mxu0
      %v1400 = vadd.f32 %v1230, %v1399
      %v1401 = vpop.f32.mrf.mxu0
      %1402 = vmatprep.mubr.bf16.mxu0 0
      %1403 = vmatmul.mubr.bf16.gmra.mxu0 %v1266
      %v1404 = vpop.f32.mrf.mxu0
      %v1405 = vadd.f32 %v1230, %v1404
      %v1406 = vpop.f32.mrf.mxu0
      %v1407 = vpop.f32.mrf.mxu0
      %v1408 = vadd.f32 %v1230, %v1407
      %v1409 = vpop.f32.mrf.mxu0
      %1410 = vdwg.mxu0
      %1411 = vst [vmem:[%s334] sm:$0xff] %v1357
      %1412 = vst [vmem:[%s334 + $0x8] sm:$0xff] %v1360
      %1413 = vst [vmem:[%s334 + $0x10] sm:$0xff] %v1365
      %1414 = vst [vmem:[%s334 + $0x18] sm:$0xff] %v1368
      %1415 = vst [vmem:[%s334 + $0x20] sm:$0xff] %v1373
      %1416 = vst [vmem:[%s334 + $0x28] sm:$0xff] %v1376
      %1417 = vst [vmem:[%s334 + $0x30] sm:$0xff] %v1381
      %1418 = vst [vmem:[%s334 + $0x38] sm:$0xff] %v1384
      %1419 = vst [vmem:[%s334 + $0x40] sm:$0xff] %v1389
      %1420 = vst [vmem:[%s334 + $0x48] sm:$0xff] %v1392
      %1421 = vst [vmem:[%s334 + $0x50] sm:$0xff] %v1397
      %1422 = vst [vmem:[%s334 + $0x58] sm:$0xff] %v1400
      %1423 = vst [vmem:[%s334 + $0x60] sm:$0xff] %v1405
      %1424 = vst [vmem:[%s334 + $0x68] sm:$0xff] %v1408
      %s1425 = smul.u32 14, %s20
      %p1426 = scmp.lt.s32.totalorder %s1425, 27
      %s1427 = scalar_select %p1426, %s1425, 27
      %s1428 = smul.addr %s1427, 8
      %s1429 = scalar_lea.vmem %s9, %s1428
      // Predicated region
      $region57: #{linear4.1} parent=55 // pred_check
        %p1430 = pneg %p232
      $region58: #{linear4.1} parent=55 // pred_check_branch
        %1432 = sbr.rel (%p1430) target = $region60
      $region59: #{linear4.1} parent=55 // pred_region
        %s1433 = smul.u32 14, %s20
      $region60: #{linear4.1} parent=55 // pred_fallthru
        _
    $region56: #{linear4.1} parent=5 // pred_fallthru
      _
    %p1434 = scmp.le.s32.totalorder 2, %s15
    // Predicated region
    $region61: #{linear4.1} parent=5 // pred_check
      %p1435 = pneg %p1434
    $region62: #{linear4.1} parent=5 // pred_check_branch
      %1437 = sbr.rel (%p1435) target = $region64
    $region63: #{linear4.1} parent=5 // pred_region
      %s1438 = ssub.s32 %s15, 2
      // Predicated region
      $region65: #{linear4.1} parent=63 // pred_check
        %p1439 = pneg %p238
      $region66: #{linear4.1} parent=63 // pred_check_branch
        %1441 = sbr.rel (%p1439) target = $region68
      $region67: #{linear4.1} parent=63 // pred_region
        %s1442 = smul.u32 14, %s21
        %p1443 = scmp.lt.s32.totalorder %s1442, 27
        %s1444 = scalar_select %p1443, %s1442, 27
        %s1445 = smul.addr %s1444, 8
        %s1446 = scalar_lea.vmem %s9, %s1445
      $region68: #{linear4.1} parent=63 // pred_fallthru
        _
    $region64: #{linear4.1} parent=5 // pred_fallthru
      _
  $region6: #{linear4.1} parent=0 // loop_footer
    %s19 = sadd.s32 1, %s15
  $region7: #{linear4.1} parent=0 // loop_footer_branch
    %14 = sbr.rel target = $region3
  $region8: #{linear4.1} parent=0 // loop_exit
    _

</llo_original>
